<compile_context>
chip_gen: v7x
topology: tpu7x:2x2x1
jax: 0.10.0
libtpu: 0.0.40
codegen_flags: <defaults>
</compile_context>

<pallas_src>
import jax
import jax.numpy as jnp
from jax import lax
from jax.experimental import pallas as pl
from jax.experimental.pallas import tpu as pltpu


_ACTIVATIONS = {
    "tanh": jnp.tanh,
    "relu": lambda v: jnp.maximum(v, 0.0),
    "gelu": jax.nn.gelu,
    "sigmoid": jax.nn.sigmoid,
    "elu": jax.nn.elu,
}

# "NT" contraction (rhs transposed), as used by the reference TPU flash-attention
# kernel: contract dim 1 of W1 (state_dim) with dim 1 of the x tile (state_dim),
# so the batch lands on the lane axis of the result.
_NT_DIMS = (((1,), (1,)), ((), ()))


def _make_critic_kernel(act_fn):
    def kernel(x_ref, w1_ref, w2_ref, bw_ref, b3_ref, out_ref):
        # x tile: (batch_tile, state_dim) -- natural layout, contiguous DMA.
        x = x_ref[...]
        bw = bw_ref[...]                  # (hidden, 3) = [b1 | b2 | w3] columns
        b1 = bw[:, 0:1]
        b2 = bw[:, 1:2]
        w3 = bw[:, 2:3]

        # fc1: (hidden, state_dim) x (batch_tile, state_dim)^T -> (hidden, bt),
        # batch on lanes, f32 accumulation on the MXU.
        h1 = lax.dot_general(w1_ref[...], x, _NT_DIMS,
                             preferred_element_type=jnp.float32)
        h1 = act_fn(h1 + b1)                       # bias + activation (VPU/EUP)

        # fc2: (hidden, hidden) @ (hidden, bt) -> (hidden, bt).
        h2 = jnp.dot(w2_ref[...], h1, preferred_element_type=jnp.float32)
        h2 = act_fn(h2 + b2)

        # fc3 (output width 1): VPU multiply + sublane (XLU) reduce instead of a
        # degenerate N=1 MXU matmul; result (1, bt) is lane-dense.
        v = jnp.sum(h2 * w3, axis=0, keepdims=True)
        out_ref[...] = (v + b3_ref[0, 0]).astype(out_ref.dtype)

    return kernel


def _pick_batch_tile(B, requested):
    """Batch tile (lane axis), always a multiple of 128."""
    if requested is not None:
        return max(128, (int(requested) // 128) * 128)
    b128 = pl.cdiv(B, 128) * 128
    bt = min(4096, b128)                     # largest tile worth having here
    if b128 >= 8 * 1024:                     # big batch: aim for >= 8 grid steps
        bt = min(bt, max(1024, (b128 // 8 // 128) * 128))
    elif b128 >= 2 * 1024:                   # enough batch for a >= 2-way split
        bt = min(bt, max(1024, (b128 // 2 // 128) * 128))   # (v7x: 2 TensorCores)
    return bt


def critic_forward(state, params, *, activation="tanh", batch_tile=None):
    """Critic forward pass.

    state:  (B, state_dim) float array.
    params: PyTorch nn.Linear layout:
            w1 (hidden, state_dim), b1 (hidden,),
            w2 (hidden, hidden),    b2 (hidden,),
            w3 (1, hidden),         b3 (1,)
    Returns value: (B, 1) float32.
    """
    w1, b1, w2, b2, w3, b3 = params
    B, state_dim = state.shape
    hidden = w1.shape[0]
    act_fn = _ACTIVATIONS[activation] if isinstance(activation, str) else activation

    bt = _pick_batch_tile(B, batch_tile)
    b_pad = pl.cdiv(B, bt) * bt
    grid = (b_pad // bt,)

    x = state.astype(jnp.float32)
    if b_pad != B:
        # Only the ragged tail is padded (zeros -> finite values in padded lanes,
        # sliced off below).  No transpose, no dtype repack of the input.
        x = jnp.pad(x, ((0, b_pad - B), (0, 0)))

    # Tiny resident operands (f32): weights in native nn.Linear layout, plus
    # b1|b2|w3 packed into a single (hidden, 3) array, and b3 as an SMEM scalar.
    w1c = w1.astype(jnp.float32)
    w2c = w2.astype(jnp.float32)
    bw = jnp.stack(
        [b1.reshape(hidden), b2.reshape(hidden), w3.reshape(hidden)], axis=1
    ).astype(jnp.float32)                                      # (hidden, 3)
    b3c = b3.reshape(1, 1).astype(jnp.float32)

    out = pl.pallas_call(
        _make_critic_kernel(act_fn),
        out_shape=jax.ShapeDtypeStruct((1, b_pad), jnp.float32),
        grid=grid,
        in_specs=[
            pl.BlockSpec((bt, state_dim), lambda i: (i, 0)),        # x tile (contiguous)
            pl.BlockSpec((hidden, state_dim), lambda i: (0, 0)),    # W1 (resident)
            pl.BlockSpec((hidden, hidden), lambda i: (0, 0)),       # W2 (resident)
            pl.BlockSpec((hidden, 3), lambda i: (0, 0)),            # b1|b2|w3 (resident)
            pl.BlockSpec(memory_space=pltpu.MemorySpace.SMEM),      # b3 scalar in SMEM
        ],
        out_specs=pl.BlockSpec((1, bt), lambda i: (0, i)),          # lane-dense output
        compiler_params=pltpu.CompilerParams(
            dimension_semantics=("parallel",),
        ),
    )(x, w1c, w2c, bw, b3c)

    return out[0, :B].reshape(B, 1)   # (1, B) -> (B, 1) is a pure reshape (free)


def init_params(key, state_dim, hidden_dim):
    """Deterministic synthetic parameters in PyTorch nn.Linear layout."""
    ks = jax.random.split(key, 6)
    s1 = 1.0 / (state_dim ** 0.5)
    s2 = 1.0 / (hidden_dim ** 0.5)
    w1 = jax.random.uniform(ks[0], (hidden_dim, state_dim), jnp.float32, -s1, s1)
    b1 = jax.random.uniform(ks[1], (hidden_dim,), jnp.float32, -s1, s1)
    w2 = jax.random.uniform(ks[2], (hidden_dim, hidden_dim), jnp.float32, -s2, s2)
    b2 = jax.random.uniform(ks[3], (hidden_dim,), jnp.float32, -s2, s2)
    w3 = jax.random.uniform(ks[4], (1, hidden_dim), jnp.float32, -s2, s2)
    b3 = jax.random.uniform(ks[5], (1,), jnp.float32, -s2, s2)
    return (w1, b1, w2, b2, w3, b3)


def _reference(state, params, act_fn):
    w1, b1, w2, b2, w3, b3 = params
    h1 = act_fn(state @ w1.T + b1)
    h2 = act_fn(h1 @ w2.T + b2)
    return h2 @ w3.T + b3


if __name__ == "__main__":
    # Shapes consistent with the module: state_dim=16, hidden_dim=32.
    state_dim, hidden_dim = 16, 32
    key = jax.random.PRNGKey(0)
    k_param, k_state = jax.random.split(key)
    params = init_params(k_param, state_dim, hidden_dim)

    # Case 1: B=512 -> single grid step, no padding, tanh.
    s1 = jax.random.normal(jax.random.fold_in(k_state, 0), (512, state_dim), jnp.float32)
    v1 = jax.block_until_ready(critic_forward(s1, params, activation="tanh"))
    r1 = _reference(s1, params, jnp.tanh)
    assert v1.shape == (512, 1)
    assert jnp.allclose(v1, r1, atol=1e-5, rtol=1e-5)

    # Case 2: B=4096 -> multi-step grid (batch axis is "parallel"), tanh.
    s2 = jax.random.normal(jax.random.fold_in(k_state, 1), (4096, state_dim), jnp.float32)
    v2 = jax.block_until_ready(critic_forward(s2, params, activation="tanh"))
    r2 = _reference(s2, params, jnp.tanh)
    assert v2.shape == (4096, 1)
    assert jnp.allclose(v2, r2, atol=1e-5, rtol=1e-5)

    # Case 3: ragged batch (B=300) + relu -> exercises tail padding + the
    # configurable activation the module takes as a ctor argument.
    s3 = jax.random.normal(jax.random.fold_in(k_state, 2), (300, state_dim), jnp.float32)
    v3 = jax.block_until_ready(critic_forward(s3, params, activation="relu"))
    r3 = _reference(s3, params, lambda v: jnp.maximum(v, 0.0))
    assert v3.shape == (300, 1)
    assert jnp.allclose(v3, r3, atol=1e-5, rtol=1e-5)

    print("KERNEL_OK")
</pallas_src>

<mosaic_0001>
module attributes {stable_mosaic.version = 11 : i64} {
  func.func @kernel(%arg0: i32, %arg1: memref<512x16xf32, #tpu.memory_space<vmem>>, %arg2: memref<32x16xf32, #tpu.memory_space<vmem>>, %arg3: memref<32x32xf32, #tpu.memory_space<vmem>>, %arg4: memref<32x3xf32, #tpu.memory_space<vmem>>, %arg5: memref<1x1xf32, #tpu.memory_space<smem>>, %arg6: memref<1x512xf32, #tpu.memory_space<vmem>>) attributes {dimension_semantics = [#tpu.dimension_semantics<parallel>], iteration_bounds = array<i64: 1>, scalar_prefetch = 0 : i64, scratch_operands = 0 : i64, tpu.core_type = #tpu.core_type<tc>, window_params = [{transform_indices = @transform_0, window_bounds = array<i64: 512, 16>}, {pipeline_mode = #tpu.pipeline_mode<synchronous>, transform_indices = @transform_1, window_bounds = array<i64: 32, 16>}, {pipeline_mode = #tpu.pipeline_mode<synchronous>, transform_indices = @transform_2, window_bounds = array<i64: 32, 32>}, {pipeline_mode = #tpu.pipeline_mode<synchronous>, transform_indices = @transform_3, window_bounds = array<i64: 32, 3>}, {transform_indices = @transform_4, window_bounds = array<i64: 1, 1>}, {transform_indices = @transform_5, window_bounds = array<i64: 1, 512>}]} {
    %c0 = arith.constant 0 : index
    %c0_0 = arith.constant 0 : index
    %0 = vector.load %arg1[%c0, %c0_0] : memref<512x16xf32, #tpu.memory_space<vmem>>, vector<512x16xf32>
    %c0_1 = arith.constant 0 : index
    %c0_2 = arith.constant 0 : index
    %1 = vector.load %arg4[%c0_1, %c0_2] : memref<32x3xf32, #tpu.memory_space<vmem>>, vector<32x3xf32>
    %2 = vector.extract_strided_slice %1 {offsets = [0, 0], sizes = [32, 1], strides = [1, 1]} : vector<32x3xf32> to vector<32x1xf32>
    %3 = vector.extract_strided_slice %1 {offsets = [0, 1], sizes = [32, 1], strides = [1, 1]} : vector<32x3xf32> to vector<32x1xf32>
    %4 = vector.extract_strided_slice %1 {offsets = [0, 2], sizes = [32, 1], strides = [1, 1]} : vector<32x3xf32> to vector<32x1xf32>
    %c0_3 = arith.constant 0 : index
    %c0_4 = arith.constant 0 : index
    %5 = vector.load %arg2[%c0_3, %c0_4] : memref<32x16xf32, #tpu.memory_space<vmem>>, vector<32x16xf32>
    %cst = arith.constant dense<0.000000e+00> : vector<32x512xf32>
    %6 = tpu.matmul %5, %0, %cst {dimension_numbers = #tpu.dot_dimension_numbers<[1], [1], [0], [0], [0, 0, 1, 0], [], []>} : vector<32x16xf32>, vector<512x16xf32>, vector<32x512xf32> -> vector<32x512xf32>
    %7 = vector.broadcast %2 : vector<32x1xf32> to vector<32x512xf32>
    %8 = arith.addf %6, %7 : vector<32x512xf32>
    %9 = math.tanh %8 : vector<32x512xf32>
    %c0_5 = arith.constant 0 : index
    %c0_6 = arith.constant 0 : index
    %10 = vector.load %arg3[%c0_5, %c0_6] : memref<32x32xf32, #tpu.memory_space<vmem>>, vector<32x32xf32>
    %cst_7 = arith.constant dense<0.000000e+00> : vector<32x512xf32>
    %11 = tpu.matmul %10, %9, %cst_7 {dimension_numbers = #tpu.dot_dimension_numbers<[1], [0], [0], [1], [0, 0, 1, 1], [], []>} : vector<32x32xf32>, vector<32x512xf32>, vector<32x512xf32> -> vector<32x512xf32>
    %12 = vector.broadcast %3 : vector<32x1xf32> to vector<32x512xf32>
    %13 = arith.addf %11, %12 : vector<32x512xf32>
    %14 = math.tanh %13 : vector<32x512xf32>
    %15 = vector.broadcast %4 : vector<32x1xf32> to vector<32x512xf32>
    %16 = arith.mulf %14, %15 : vector<32x512xf32>
    %cst_8 = arith.constant dense<0.000000e+00> : vector<512xf32>
    %17 = vector.multi_reduction <add>, %16, %cst_8 [0] : vector<32x512xf32> to vector<512xf32>
    %18 = vector.shape_cast %17 : vector<512xf32> to vector<1x512xf32>
    %c0_9 = arith.constant 0 : index
    %c0_10 = arith.constant 0 : index
    %19 = memref.load %arg5[%c0_9, %c0_10] : memref<1x1xf32, #tpu.memory_space<smem>>
    %20 = vector.broadcast %19 : f32 to vector<1x512xf32>
    %21 = arith.addf %18, %20 : vector<1x512xf32>
    %c0_11 = arith.constant 0 : index
    %c0_12 = arith.constant 0 : index
    %22 = vector.load %arg6[%c0_11, %c0_12] : memref<1x512xf32, #tpu.memory_space<vmem>>, vector<1x512xf32>
    tpu.vector_store %arg6[%c0_11, %c0_12], %21 {strides = array<i32>} : memref<1x512xf32, #tpu.memory_space<vmem>>, vector<1x512xf32>,
    return
  }
  func.func @transform_0(%arg0: i32) -> (i32, i32) {
    %c0_i32 = arith.constant 0 : i32
    %c0_i32_0 = arith.constant 0 : i32
    return %arg0, %c0_i32 : i32, i32
  }
  func.func @transform_1(%arg0: i32) -> (i32, i32) {
    %c0_i32 = arith.constant 0 : i32
    %c0_i32_0 = arith.constant 0 : i32
    %c0_i32_1 = arith.constant 0 : i32
    return %c0_i32, %c0_i32_0 : i32, i32
  }
  func.func @transform_2(%arg0: i32) -> (i32, i32) {
    %c0_i32 = arith.constant 0 : i32
    %c0_i32_0 = arith.constant 0 : i32
    %c0_i32_1 = arith.constant 0 : i32
    return %c0_i32, %c0_i32_0 : i32, i32
  }
  func.func @transform_3(%arg0: i32) -> (i32, i32) {
    %c0_i32 = arith.constant 0 : i32
    %c0_i32_0 = arith.constant 0 : i32
    %c0_i32_1 = arith.constant 0 : i32
    return %c0_i32, %c0_i32_0 : i32, i32
  }
  func.func @transform_4(%arg0: i32) -> (i32, i32) {
    %c0_i32 = arith.constant 0 : i32
    %c0_i32_0 = arith.constant 0 : i32
    %c0_i32_1 = arith.constant 0 : i32
    return %c0_i32, %c0_i32_0 : i32, i32
  }
  func.func @transform_5(%arg0: i32) -> (i32, i32) {
    %c0_i32 = arith.constant 0 : i32
    %c0_i32_0 = arith.constant 0 : i32
    return %c0_i32, %arg0 : i32, i32
  }
}

</mosaic_0001>

<llo_original>
// kernel: tpu_custom_call.1
$region0: #{tpu_custom_call.1}
  #allocation0 [shape = 'u32[]', space=smem, size = 0x4, offset = 0x4, fixed_abs, tag = 'smem constant byte address 0x4 - core index']
  #allocation1 [shape = 'u32[144,128]{1,0:T(1,128)}', space=vmem, size = 0x12000, scoped, tag = 'internal scratch']
  #allocation2 [shape = 'f32[1,1]{1,0:T(1,128)S(6)}', space=smem, size = 0x200, scoped, tag = 'scoped memory for tpu_custom_call.1']
  %s0 = inlined_call_operand.vmem [shape: f32[512,16], index: 0, kind: input, shape index: {}]
  %s1 = inlined_call_operand.vmem [shape: f32[32,16], index: 1, kind: input, shape index: {}]
  %s2 = inlined_call_operand.vmem [shape: f32[32,32], index: 2, kind: input, shape index: {}]
  %s3 = inlined_call_operand.vmem [shape: f32[32,3], index: 3, kind: input, shape index: {}]
  %s4 = inlined_call_operand.<no memory space> [shape: f32[1,1], index: 4, kind: input, shape index: {}]
  %s5 = inlined_call_operand.hbm [shape: f32[1,512], index: 5, kind: output, shape index: {}]
  %s6 = sld [smem:[#allocation0]]
  $region30: #{tpu_custom_call.1} parent=0
    _
  %s8 = ssub.s32 1, %s6
  %s9 = scalar_select 0, %s8, %s6
  %10 = sst [smem:[#allocation2]] %s4
  $region1: #{tpu_custom_call.1} parent=0
    #allocation3 [shape = 'u8[2048]{0}', space=vmem, size = 0x800, scoped, tag = 'output window, operand 0, single buffered']
    #allocation4 [shape = 's32[1]{0}', space=sflag, size = 0x4, scoped, tag = 'scoped memory for tpu_custom_call.1']
    %11 = vsyncpa [#allocation4], 0
    // Predicated region
    $region2: #{tpu_custom_call.1} parent=1 // pred_check
      _
    $region3: #{tpu_custom_call.1} parent=1 // pred_check_branch
      %13 = sbr.rel (0) target = $region5
    $region4: #{tpu_custom_call.1} parent=1 // pred_region
      _
    $region5: #{tpu_custom_call.1} parent=1 // pred_fallthru
      _
    // Predicated region
    $region6: #{tpu_custom_call.1} parent=1 // pred_check
      _
    $region7: #{tpu_custom_call.1} parent=1 // pred_check_branch
      %15 = sbr.rel (0) target = $region9
    $region8: #{tpu_custom_call.1} parent=1 // pred_region
      _
    $region9: #{tpu_custom_call.1} parent=1 // pred_fallthru
      _
    // Predicated region
    $region10: #{tpu_custom_call.1} parent=1 // pred_check
      _
    $region11: #{tpu_custom_call.1} parent=1 // pred_check_branch
      %17 = sbr.rel (0) target = $region13
    $region12: #{tpu_custom_call.1} parent=1 // pred_region
      _
    $region13: #{tpu_custom_call.1} parent=1 // pred_fallthru
      _
    // Predicated region
    $region14: #{tpu_custom_call.1} parent=1 // pred_check
      _
    $region15: #{tpu_custom_call.1} parent=1 // pred_check_branch
      %19 = sbr.rel (0) target = $region17
    $region16: #{tpu_custom_call.1} parent=1 // pred_region
      _
    $region17: #{tpu_custom_call.1} parent=1 // pred_fallthru
      _
    // Predicated region
    $region18: #{tpu_custom_call.1} parent=1 // pred_check
      _
    $region19: #{tpu_custom_call.1} parent=1 // pred_check_branch
      %21 = sbr.rel (0) target = $region21
    $region20: #{tpu_custom_call.1} parent=1 // pred_region
      _
    $region21: #{tpu_custom_call.1} parent=1 // pred_fallthru
      _
    %v22 = vld [vmem:[%s0] sm:$0xff]
    %v23 = vld [vmem:[%s0 + $0x8] sm:$0xff]
    %v24 = vld [vmem:[%s0 + $0x10] sm:$0xff]
    %v25 = vld [vmem:[%s0 + $0x18] sm:$0xff]
    %v26 = vld [vmem:[%s0 + $0x20] sm:$0xff]
    %v27 = vld [vmem:[%s0 + $0x28] sm:$0xff]
    %v28 = vld [vmem:[%s0 + $0x30] sm:$0xff]
    %v29 = vld [vmem:[%s0 + $0x38] sm:$0xff]
    %v30 = vld [vmem:[%s0 + $0x40] sm:$0xff]
    %v31 = vld [vmem:[%s0 + $0x48] sm:$0xff]
    %v32 = vld [vmem:[%s0 + $0x50] sm:$0xff]
    %v33 = vld [vmem:[%s0 + $0x58] sm:$0xff]
    %v34 = vld [vmem:[%s0 + $0x60] sm:$0xff]
    %v35 = vld [vmem:[%s0 + $0x68] sm:$0xff]
    %v36 = vld [vmem:[%s0 + $0x70] sm:$0xff]
    %v37 = vld [vmem:[%s0 + $0x78] sm:$0xff]
    %v38 = vld [vmem:[%s0 + $0x80] sm:$0xff]
    %v39 = vld [vmem:[%s0 + $0x88] sm:$0xff]
    %v40 = vld [vmem:[%s0 + $0x90] sm:$0xff]
    %v41 = vld [vmem:[%s0 + $0x98] sm:$0xff]
    %v42 = vld [vmem:[%s0 + $0xa0] sm:$0xff]
    %v43 = vld [vmem:[%s0 + $0xa8] sm:$0xff]
    %v44 = vld [vmem:[%s0 + $0xb0] sm:$0xff]
    %v45 = vld [vmem:[%s0 + $0xb8] sm:$0xff]
    %v46 = vld [vmem:[%s0 + $0xc0] sm:$0xff]
    %v47 = vld [vmem:[%s0 + $0xc8] sm:$0xff]
    %v48 = vld [vmem:[%s0 + $0xd0] sm:$0xff]
    %v49 = vld [vmem:[%s0 + $0xd8] sm:$0xff]
    %v50 = vld [vmem:[%s0 + $0xe0] sm:$0xff]
    %v51 = vld [vmem:[%s0 + $0xe8] sm:$0xff]
    %v52 = vld [vmem:[%s0 + $0xf0] sm:$0xff]
    %v53 = vld [vmem:[%s0 + $0xf8] sm:$0xff]
    %v54 = vld [vmem:[%s0 + $0x100] sm:$0xff]
    %v55 = vld [vmem:[%s0 + $0x108] sm:$0xff]
    %v56 = vld [vmem:[%s0 + $0x110] sm:$0xff]
    %v57 = vld [vmem:[%s0 + $0x118] sm:$0xff]
    %v58 = vld [vmem:[%s0 + $0x120] sm:$0xff]
    %v59 = vld [vmem:[%s0 + $0x128] sm:$0xff]
    %v60 = vld [vmem:[%s0 + $0x130] sm:$0xff]
    %v61 = vld [vmem:[%s0 + $0x138] sm:$0xff]
    %v62 = vld [vmem:[%s0 + $0x140] sm:$0xff]
    %v63 = vld [vmem:[%s0 + $0x148] sm:$0xff]
    %v64 = vld [vmem:[%s0 + $0x150] sm:$0xff]
    %v65 = vld [vmem:[%s0 + $0x158] sm:$0xff]
    %v66 = vld [vmem:[%s0 + $0x160] sm:$0xff]
    %v67 = vld [vmem:[%s0 + $0x168] sm:$0xff]
    %v68 = vld [vmem:[%s0 + $0x170] sm:$0xff]
    %v69 = vld [vmem:[%s0 + $0x178] sm:$0xff]
    %v70 = vld [vmem:[%s0 + $0x180] sm:$0xff]
    %v71 = vld [vmem:[%s0 + $0x188] sm:$0xff]
    %v72 = vld [vmem:[%s0 + $0x190] sm:$0xff]
    %v73 = vld [vmem:[%s0 + $0x198] sm:$0xff]
    %v74 = vld [vmem:[%s0 + $0x1a0] sm:$0xff]
    %v75 = vld [vmem:[%s0 + $0x1a8] sm:$0xff]
    %v76 = vld [vmem:[%s0 + $0x1b0] sm:$0xff]
    %v77 = vld [vmem:[%s0 + $0x1b8] sm:$0xff]
    %v78 = vld [vmem:[%s0 + $0x1c0] sm:$0xff]
    %v79 = vld [vmem:[%s0 + $0x1c8] sm:$0xff]
    %v80 = vld [vmem:[%s0 + $0x1d0] sm:$0xff]
    %v81 = vld [vmem:[%s0 + $0x1d8] sm:$0xff]
    %v82 = vld [vmem:[%s0 + $0x1e0] sm:$0xff]
    %v83 = vld [vmem:[%s0 + $0x1e8] sm:$0xff]
    %v84 = vld [vmem:[%s0 + $0x1f0] sm:$0xff]
    %v85 = vld [vmem:[%s0 + $0x1f8] sm:$0xff]
    %v86 = vld [vmem:[%s3] sm:$0xff]
    %v87 = vld [vmem:[%s3 + $0x8] sm:$0xff]
    %v88 = vld [vmem:[%s3 + $0x10] sm:$0xff]
    %v89 = vld [vmem:[%s3 + $0x18] sm:$0xff]
    %v90 = vld [vmem:[%s1] sm:$0xff]
    %v91 = vld [vmem:[%s1 + $0x8] sm:$0xff]
    %v92 = vld [vmem:[%s1 + $0x10] sm:$0xff]
    %v93 = vld [vmem:[%s1 + $0x18] sm:$0xff]
    %95 = vset.pattern.permute.xlu0 0
    %96 = vperm.xlu0 %95, %v86
    %v97 = vpop.permute.xlu0 %96
    %100 = vset.pattern.permute.xlu0 0
    %101 = vperm.xlu0 %100, %v87
    %v102 = vpop.permute.xlu0 %101
    %105 = vset.pattern.permute.xlu0 0
    %106 = vperm.xlu0 %105, %v88
    %v107 = vpop.permute.xlu0 %106
    %110 = vset.pattern.permute.xlu0 0
    %111 = vperm.xlu0 %110, %v89
    %v112 = vpop.permute.xlu0 %111
    %vm114 = vcmask 130048
    %v116 = vsel %vm114, %v90, 0
    %v119 = vsel %vm114, %v91, 0
    %v122 = vsel %vm114, %v92, 0
    %v125 = vsel %vm114, %v93, 0
    %v128 = vsel %vm114, %v22, 0
    %v131 = vsel %vm114, %v23, 0
    %v134 = vsel %vm114, %v24, 0
    %v137 = vsel %vm114, %v25, 0
    %v140 = vsel %vm114, %v26, 0
    %v143 = vsel %vm114, %v27, 0
    %v146 = vsel %vm114, %v28, 0
    %v149 = vsel %vm114, %v29, 0
    %v152 = vsel %vm114, %v30, 0
    %v155 = vsel %vm114, %v31, 0
    %v158 = vsel %vm114, %v32, 0
    %v161 = vsel %vm114, %v33, 0
    %v164 = vsel %vm114, %v34, 0
    %v167 = vsel %vm114, %v35, 0
    %v170 = vsel %vm114, %v36, 0
    %v173 = vsel %vm114, %v37, 0
    %v176 = vsel %vm114, %v38, 0
    %v179 = vsel %vm114, %v39, 0
    %v182 = vsel %vm114, %v40, 0
    %v185 = vsel %vm114, %v41, 0
    %v188 = vsel %vm114, %v42, 0
    %v191 = vsel %vm114, %v43, 0
    %v194 = vsel %vm114, %v44, 0
    %v197 = vsel %vm114, %v45, 0
    %v200 = vsel %vm114, %v46, 0
    %v203 = vsel %vm114, %v47, 0
    %v206 = vsel %vm114, %v48, 0
    %v209 = vsel %vm114, %v49, 0
    %v212 = vsel %vm114, %v50, 0
    %v215 = vsel %vm114, %v51, 0
    %v218 = vsel %vm114, %v52, 0
    %v221 = vsel %vm114, %v53, 0
    %v224 = vsel %vm114, %v54, 0
    %v227 = vsel %vm114, %v55, 0
    %v230 = vsel %vm114, %v56, 0
    %v233 = vsel %vm114, %v57, 0
    %v236 = vsel %vm114, %v58, 0
    %v239 = vsel %vm114, %v59, 0
    %v242 = vsel %vm114, %v60, 0
    %v245 = vsel %vm114, %v61, 0
    %v248 = vsel %vm114, %v62, 0
    %v251 = vsel %vm114, %v63, 0
    %v254 = vsel %vm114, %v64, 0
    %v257 = vsel %vm114, %v65, 0
    %v260 = vsel %vm114, %v66, 0
    %v263 = vsel %vm114, %v67, 0
    %v266 = vsel %vm114, %v68, 0
    %v269 = vsel %vm114, %v69, 0
    %v272 = vsel %vm114, %v70, 0
    %v275 = vsel %vm114, %v71, 0
    %v278 = vsel %vm114, %v72, 0
    %v281 = vsel %vm114, %v73, 0
    %v284 = vsel %vm114, %v74, 0
    %v287 = vsel %vm114, %v75, 0
    %v290 = vsel %vm114, %v76, 0
    %v293 = vsel %vm114, %v77, 0
    %v296 = vsel %vm114, %v78, 0
    %v299 = vsel %vm114, %v79, 0
    %v302 = vsel %vm114, %v80, 0
    %v305 = vsel %vm114, %v81, 0
    %v308 = vsel %vm114, %v82, 0
    %v311 = vsel %vm114, %v83, 0
    %v314 = vsel %vm114, %v84, 0
    %v317 = vsel %vm114, %v85, 0
    %319 = vmatprep.subr.mxu0 0.0
    %320 = vmatpush1.xpose.msra.mxu0 %v128
    %321 = vmatprep.subr.mxu0 0.0
    %322 = vmatpush1.xpose.msra.mxu0 %v131
    %323 = vmatprep.subr.mxu0 0.0
    %324 = vmatpush1.xpose.msra.mxu0 %v134
    %325 = vmatprep.subr.mxu0 0.0
    %326 = vmatpush1.xpose.msra.mxu0 %v137
    %327 = vmatprep.subr.mxu0 0.0
    %328 = vmatpush1.xpose.msra.mxu0 %v140
    %329 = vmatprep.subr.mxu0 0.0
    %330 = vmatpush1.xpose.msra.mxu0 %v143
    %331 = vmatprep.subr.mxu0 0.0
    %332 = vmatpush1.xpose.msra.mxu0 %v146
    %333 = vmatprep.subr.mxu0 0.0
    %334 = vmatpush1.xpose.msra.mxu0 %v149
    %335 = vmatprep.subr.mxu0 0.0
    %336 = vmatpush1.xpose.msra.mxu0 %v152
    %337 = vmatprep.subr.mxu0 0.0
    %338 = vmatpush1.xpose.msra.mxu0 %v155
    %339 = vmatprep.subr.mxu0 0.0
    %340 = vmatpush1.xpose.msra.mxu0 %v158
    %341 = vmatprep.subr.mxu0 0.0
    %342 = vmatpush1.xpose.msra.mxu0 %v161
    %343 = vmatprep.subr.mxu0 0.0
    %344 = vmatpush1.xpose.msra.mxu0 %v164
    %345 = vmatprep.subr.mxu0 0.0
    %346 = vmatpush1.xpose.msra.mxu0 %v167
    %347 = vmatprep.subr.mxu0 0.0
    %348 = vmatpush1.xpose.msra.mxu0 %v170
    %349 = vmatprep.subr.mxu0 0.0
    %350 = vmatpush1.xpose.msra.mxu0 %v173
    %351 = vmatprep.subr.mxu0 0.0
    %352 = vmatpush1.xpose.msra.mxu0 %v176
    %353 = vmatprep.subr.mxu0 0.0
    %354 = vmatpush1.xpose.msra.mxu0 %v179
    %355 = vmatprep.subr.mxu0 0.0
    %356 = vmatpush1.xpose.msra.mxu0 %v182
    %357 = vmatprep.subr.mxu0 0.0
    %358 = vmatpush1.xpose.msra.mxu0 %v185
    %359 = vmatprep.subr.mxu0 0.0
    %360 = vmatpush1.xpose.msra.mxu0 %v188
    %361 = vmatprep.subr.mxu0 0.0
    %362 = vmatpush1.xpose.msra.mxu0 %v191
    %363 = vmatprep.subr.mxu0 0.0
    %364 = vmatpush1.xpose.msra.mxu0 %v194
    %365 = vmatprep.subr.mxu0 0.0
    %366 = vmatpush1.xpose.msra.mxu0 %v197
    %367 = vmatprep.subr.mxu0 0.0
    %368 = vmatpush1.xpose.msra.mxu0 %v200
    %369 = vmatprep.subr.mxu0 0.0
    %370 = vmatpush1.xpose.msra.mxu0 %v203
    %371 = vmatprep.subr.mxu0 0.0
    %372 = vmatpush1.xpose.msra.mxu0 %v206
    %373 = vmatprep.subr.mxu0 0.0
    %374 = vmatpush1.xpose.msra.mxu0 %v209
    %375 = vmatprep.subr.mxu0 0.0
    %376 = vmatpush1.xpose.msra.mxu0 %v212
    %377 = vmatprep.subr.mxu0 0.0
    %378 = vmatpush1.xpose.msra.mxu0 %v215
    %379 = vmatprep.subr.mxu0 0.0
    %380 = vmatpush1.xpose.msra.mxu0 %v218
    %381 = vmatprep.subr.mxu0 0.0
    %382 = vmatpush1.xpose.msra.mxu0 %v221
    %383 = vmatprep.mubr.f32.mxu0 0.0
    %384 = vmatmul.mubr.f32.gmra.mrb[0].mxu0 %v116
    %v385 = vpop.f32.mrb[0].mxu0
    %v386 = vadd.f32 %v97, %v385
    %v387 = vpop.f32.mrb[0].mxu0
    %v388 = vadd.f32 %v97, %v387
    %389 = vmatprep.mubr.f32.mxu0 0.0
    %390 = vmatmul.mubr.f32.gmra.mrb[0].mxu0 %v119
    %v391 = vpop.f32.mrb[0].mxu0
    %v392 = vadd.f32 %v102, %v391
    %v393 = vpop.f32.mrb[0].mxu0
    %v394 = vadd.f32 %v102, %v393
    %395 = vmatprep.mubr.f32.mxu0 0.0
    %396 = vmatmul.mubr.f32.gmra.mrb[0].mxu0 %v122
    %v397 = vpop.f32.mrb[0].mxu0
    %v398 = vadd.f32 %v107, %v397
    %v399 = vpop.f32.mrb[0].mxu0
    %v400 = vadd.f32 %v107, %v399
    %401 = vmatprep.mubr.f32.mxu0 0.0
    %402 = vmatmul.mubr.f32.gmra.mrb[0].mxu0 %v125
    %v403 = vpop.f32.mrb[0].mxu0
    %v404 = vadd.f32 %v112, %v403
    %v405 = vpop.f32.mrb[0].mxu0
    %v406 = vadd.f32 %v112, %v405
    %407 = vdwg.mxu0
    %408 = vmatprep.subr.mxu0 0.0
    %409 = vmatpush1.xpose.msra.mxu0 %v224
    %410 = vmatprep.subr.mxu0 0.0
    %411 = vmatpush1.xpose.msra.mxu0 %v227
    %412 = vmatprep.subr.mxu0 0.0
    %413 = vmatpush1.xpose.msra.mxu0 %v230
    %414 = vmatprep.subr.mxu0 0.0
    %415 = vmatpush1.xpose.msra.mxu0 %v233
    %416 = vmatprep.subr.mxu0 0.0
    %417 = vmatpush1.xpose.msra.mxu0 %v236
    %418 = vmatprep.subr.mxu0 0.0
    %419 = vmatpush1.xpose.msra.mxu0 %v239
    %420 = vmatprep.subr.mxu0 0.0
    %421 = vmatpush1.xpose.msra.mxu0 %v242
    %422 = vmatprep.subr.mxu0 0.0
    %423 = vmatpush1.xpose.msra.mxu0 %v245
    %424 = vmatprep.subr.mxu0 0.0
    %425 = vmatpush1.xpose.msra.mxu0 %v248
    %426 = vmatprep.subr.mxu0 0.0
    %427 = vmatpush1.xpose.msra.mxu0 %v251
    %428 = vmatprep.subr.mxu0 0.0
    %429 = vmatpush1.xpose.msra.mxu0 %v254
    %430 = vmatprep.subr.mxu0 0.0
    %431 = vmatpush1.xpose.msra.mxu0 %v257
    %432 = vmatprep.subr.mxu0 0.0
    %433 = vmatpush1.xpose.msra.mxu0 %v260
    %434 = vmatprep.subr.mxu0 0.0
    %435 = vmatpush1.xpose.msra.mxu0 %v263
    %436 = vmatprep.subr.mxu0 0.0
    %437 = vmatpush1.xpose.msra.mxu0 %v266
    %438 = vmatprep.subr.mxu0 0.0
    %439 = vmatpush1.xpose.msra.mxu0 %v269
    %440 = vmatprep.subr.mxu0 0.0
    %441 = vmatpush1.xpose.msra.mxu0 %v272
    %442 = vmatprep.subr.mxu0 0.0
    %443 = vmatpush1.xpose.msra.mxu0 %v275
    %444 = vmatprep.subr.mxu0 0.0
    %445 = vmatpush1.xpose.msra.mxu0 %v278
    %446 = vmatprep.subr.mxu0 0.0
    %447 = vmatpush1.xpose.msra.mxu0 %v281
    %448 = vmatprep.subr.mxu0 0.0
    %449 = vmatpush1.xpose.msra.mxu0 %v284
    %450 = vmatprep.subr.mxu0 0.0
    %451 = vmatpush1.xpose.msra.mxu0 %v287
    %452 = vmatprep.subr.mxu0 0.0
    %453 = vmatpush1.xpose.msra.mxu0 %v290
    %454 = vmatprep.subr.mxu0 0.0
    %455 = vmatpush1.xpose.msra.mxu0 %v293
    %456 = vmatprep.subr.mxu0 0.0
    %457 = vmatpush1.xpose.msra.mxu0 %v296
    %458 = vmatprep.subr.mxu0 0.0
    %459 = vmatpush1.xpose.msra.mxu0 %v299
    %460 = vmatprep.subr.mxu0 0.0
    %461 = vmatpush1.xpose.msra.mxu0 %v302
    %462 = vmatprep.subr.mxu0 0.0
    %463 = vmatpush1.xpose.msra.mxu0 %v305
    %464 = vmatprep.subr.mxu0 0.0
    %465 = vmatpush1.xpose.msra.mxu0 %v308
    %466 = vmatprep.subr.mxu0 0.0
    %467 = vmatpush1.xpose.msra.mxu0 %v311
    %468 = vmatprep.subr.mxu0 0.0
    %469 = vmatpush1.xpose.msra.mxu0 %v314
    %470 = vmatprep.subr.mxu0 0.0
    %471 = vmatpush1.xpose.msra.mxu0 %v317
    %472 = vmatprep.mubr.f32.mxu0 0.0
    %473 = vmatmul.mubr.f32.gmra.mrb[0].mxu0 %v116
    %v474 = vpop.f32.mrb[0].mxu0
    %v475 = vadd.f32 %v97, %v474
    %v476 = vpop.f32.mrb[0].mxu0
    %v477 = vadd.f32 %v97, %v476
    %478 = vmatprep.mubr.f32.mxu0 0.0
    %479 = vmatmul.mubr.f32.gmra.mrb[0].mxu0 %v119
    %v480 = vpop.f32.mrb[0].mxu0
    %v481 = vadd.f32 %v102, %v480
    %v482 = vpop.f32.mrb[0].mxu0
    %v483 = vadd.f32 %v102, %v482
    %484 = vmatprep.mubr.f32.mxu0 0.0
    %485 = vmatmul.mubr.f32.gmra.mrb[0].mxu0 %v122
    %v486 = vpop.f32.mrb[0].mxu0
    %v487 = vadd.f32 %v107, %v486
    %v488 = vpop.f32.mrb[0].mxu0
    %v489 = vadd.f32 %v107, %v488
    %490 = vmatprep.mubr.f32.mxu0 0.0
    %491 = vmatmul.mubr.f32.gmra.mrb[0].mxu0 %v125
    %v492 = vpop.f32.mrb[0].mxu0
    %v493 = vadd.f32 %v112, %v492
    %v494 = vpop.f32.mrb[0].mxu0
    %v495 = vadd.f32 %v112, %v494
    %496 = vdwg.mxu0
    %v497 = vtanh.pop %v386
    %v498 = vtanh.pop %v388
    %v499 = vtanh.pop %v475
    %v500 = vtanh.pop %v477
    %v501 = vtanh.pop %v392
    %v502 = vtanh.pop %v394
    %v503 = vtanh.pop %v481
    %v504 = vtanh.pop %v483
    %v505 = vtanh.pop %v398
    %v506 = vtanh.pop %v400
    %v507 = vtanh.pop %v487
    %v508 = vtanh.pop %v489
    %v509 = vtanh.pop %v404
    %v510 = vtanh.pop %v406
    %v511 = vtanh.pop %v493
    %v512 = vtanh.pop %v495
    %v513 = vld [vmem:[%s2] sm:$0xff]
    %v514 = vld [vmem:[%s2 + $0x8] sm:$0xff]
    %v515 = vld [vmem:[%s2 + $0x10] sm:$0xff]
    %v516 = vld [vmem:[%s2 + $0x18] sm:$0xff]
    %517 = vset.pattern.permute.xlu0 1
    %518 = vperm.xlu0 %517, %v86
    %v519 = vpop.permute.xlu0 %518
    %521 = vset.pattern.permute.xlu0 1
    %522 = vperm.xlu0 %521, %v87
    %v523 = vpop.permute.xlu0 %522
    %525 = vset.pattern.permute.xlu0 1
    %526 = vperm.xlu0 %525, %v88
    %v527 = vpop.permute.xlu0 %526
    %529 = vset.pattern.permute.xlu0 1
    %530 = vperm.xlu0 %529, %v89
    %v531 = vpop.permute.xlu0 %530
    %vm533 = vcmask 261120
    %v535 = vsel %vm533, %v513, 0
    %v538 = vsel %vm533, %v514, 0
    %v541 = vsel %vm533, %v515, 0
    %v544 = vsel %vm533, %v516, 0
    %546 = vmatprep.subr.mxu0 %v498
    %547 = vmatpush1.msra.mxu0 %v497
    %548 = vmatprep.subr.mxu0 %v502
    %549 = vmatpush1.msra.mxu0 %v501
    %550 = vmatprep.subr.mxu0 %v506
    %551 = vmatpush1.msra.mxu0 %v505
    %552 = vmatprep.subr.mxu0 %v510
    %553 = vmatpush1.msra.mxu0 %v509
    %554 = vmatprep.subr.mxu0 0.0
    %555 = vmatpush1.msra.mxu0 0.0
    %556 = vmatprep.subr.mxu0 0.0
    %557 = vmatpush1.msra.mxu0 0.0
    %558 = vmatprep.subr.mxu0 0.0
    %559 = vmatpush1.msra.mxu0 0.0
    %560 = vmatprep.subr.mxu0 0.0
    %561 = vmatpush1.msra.mxu0 0.0
    %562 = vmatprep.subr.mxu0 0.0
    %563 = vmatpush1.msra.mxu0 0.0
    %564 = vmatprep.subr.mxu0 0.0
    %565 = vmatpush1.msra.mxu0 0.0
    %566 = vmatprep.subr.mxu0 0.0
    %567 = vmatpush1.msra.mxu0 0.0
    %568 = vmatprep.subr.mxu0 0.0
    %569 = vmatpush1.msra.mxu0 0.0
    %570 = vmatprep.subr.mxu0 0.0
    %571 = vmatpush1.msra.mxu0 0.0
    %572 = vmatprep.subr.mxu0 0.0
    %573 = vmatpush1.msra.mxu0 0.0
    %574 = vmatprep.subr.mxu0 0.0
    %575 = vmatpush1.msra.mxu0 0.0
    %576 = vmatprep.subr.mxu0 0.0
    %577 = vmatpush1.msra.mxu0 0.0
    %578 = vmatprep.subr.mxu0 0.0
    %579 = vmatpush1.msra.mxu0 0.0
    %580 = vmatprep.subr.mxu0 0.0
    %581 = vmatpush1.msra.mxu0 0.0
    %582 = vmatprep.subr.mxu0 0.0
    %583 = vmatpush1.msra.mxu0 0.0
    %584 = vmatprep.subr.mxu0 0.0
    %585 = vmatpush1.msra.mxu0 0.0
    %586 = vmatprep.subr.mxu0 0.0
    %587 = vmatpush1.msra.mxu0 0.0
    %588 = vmatprep.subr.mxu0 0.0
    %589 = vmatpush1.msra.mxu0 0.0
    %590 = vmatprep.subr.mxu0 0.0
    %591 = vmatpush1.msra.mxu0 0.0
    %592 = vmatprep.subr.mxu0 0.0
    %593 = vmatpush1.msra.mxu0 0.0
    %594 = vmatprep.subr.mxu0 0.0
    %595 = vmatpush1.msra.mxu0 0.0
    %596 = vmatprep.subr.mxu0 0.0
    %597 = vmatpush1.msra.mxu0 0.0
    %598 = vmatprep.subr.mxu0 0.0
    %599 = vmatpush1.msra.mxu0 0.0
    %600 = vmatprep.subr.mxu0 0.0
    %601 = vmatpush1.msra.mxu0 0.0
    %602 = vmatprep.subr.mxu0 0.0
    %603 = vmatpush1.msra.mxu0 0.0
    %604 = vmatprep.subr.mxu0 0.0
    %605 = vmatpush1.msra.mxu0 0.0
    %606 = vmatprep.subr.mxu0 0.0
    %607 = vmatpush1.msra.mxu0 0.0
    %608 = vmatprep.subr.mxu0 0.0
    %609 = vmatpush1.msra.mxu0 0.0
    %610 = vmatprep.mubr.f32.mxu0 0.0
    %611 = vmatmul.mubr.f32.gmra.mrb[0].mxu0 %v535
    %v612 = vpop.f32.mrb[0].mxu0
    %v613 = vadd.f32 %v519, %v612
    %v614 = vpop.f32.mrb[0].mxu0
    %v615 = vadd.f32 %v519, %v614
    %616 = vmatprep.mubr.f32.mxu0 0.0
    %617 = vmatmul.mubr.f32.gmra.mrb[0].mxu0 %v538
    %v618 = vpop.f32.mrb[0].mxu0
    %v619 = vadd.f32 %v523, %v618
    %v620 = vpop.f32.mrb[0].mxu0
    %v621 = vadd.f32 %v523, %v620
    %622 = vmatprep.mubr.f32.mxu0 0.0
    %623 = vmatmul.mubr.f32.gmra.mrb[0].mxu0 %v541
    %v624 = vpop.f32.mrb[0].mxu0
    %v625 = vadd.f32 %v527, %v624
    %v626 = vpop.f32.mrb[0].mxu0
    %v627 = vadd.f32 %v527, %v626
    %628 = vmatprep.mubr.f32.mxu0 0.0
    %629 = vmatmul.mubr.f32.gmra.mrb[0].mxu0 %v544
    %v630 = vpop.f32.mrb[0].mxu0
    %v631 = vadd.f32 %v531, %v630
    %v632 = vpop.f32.mrb[0].mxu0
    %v633 = vadd.f32 %v531, %v632
    %634 = vdwg.mxu0
    %635 = vmatprep.subr.mxu0 %v500
    %636 = vmatpush1.msra.mxu0 %v499
    %637 = vmatprep.subr.mxu0 %v504
    %638 = vmatpush1.msra.mxu0 %v503
    %639 = vmatprep.subr.mxu0 %v508
    %640 = vmatpush1.msra.mxu0 %v507
    %641 = vmatprep.subr.mxu0 %v512
    %642 = vmatpush1.msra.mxu0 %v511
    %643 = vmatprep.subr.mxu0 0.0
    %644 = vmatpush1.msra.mxu0 0.0
    %645 = vmatprep.subr.mxu0 0.0
    %646 = vmatpush1.msra.mxu0 0.0
    %647 = vmatprep.subr.mxu0 0.0
    %648 = vmatpush1.msra.mxu0 0.0
    %649 = vmatprep.subr.mxu0 0.0
    %650 = vmatpush1.msra.mxu0 0.0
    %651 = vmatprep.subr.mxu0 0.0
    %652 = vmatpush1.msra.mxu0 0.0
    %653 = vmatprep.subr.mxu0 0.0
    %654 = vmatpush1.msra.mxu0 0.0
    %655 = vmatprep.subr.mxu0 0.0
    %656 = vmatpush1.msra.mxu0 0.0
    %657 = vmatprep.subr.mxu0 0.0
    %658 = vmatpush1.msra.mxu0 0.0
    %659 = vmatprep.subr.mxu0 0.0
    %660 = vmatpush1.msra.mxu0 0.0
    %661 = vmatprep.subr.mxu0 0.0
    %662 = vmatpush1.msra.mxu0 0.0
    %663 = vmatprep.subr.mxu0 0.0
    %664 = vmatpush1.msra.mxu0 0.0
    %665 = vmatprep.subr.mxu0 0.0
    %666 = vmatpush1.msra.mxu0 0.0
    %667 = vmatprep.subr.mxu0 0.0
    %668 = vmatpush1.msra.mxu0 0.0
    %669 = vmatprep.subr.mxu0 0.0
    %670 = vmatpush1.msra.mxu0 0.0
    %671 = vmatprep.subr.mxu0 0.0
    %672 = vmatpush1.msra.mxu0 0.0
    %673 = vmatprep.subr.mxu0 0.0
    %674 = vmatpush1.msra.mxu0 0.0
    %675 = vmatprep.subr.mxu0 0.0
    %676 = vmatpush1.msra.mxu0 0.0
    %677 = vmatprep.subr.mxu0 0.0
    %678 = vmatpush1.msra.mxu0 0.0
    %679 = vmatprep.subr.mxu0 0.0
    %680 = vmatpush1.msra.mxu0 0.0
    %681 = vmatprep.subr.mxu0 0.0
    %682 = vmatpush1.msra.mxu0 0.0
    %683 = vmatprep.subr.mxu0 0.0
    %684 = vmatpush1.msra.mxu0 0.0
    %685 = vmatprep.subr.mxu0 0.0
    %686 = vmatpush1.msra.mxu0 0.0
    %687 = vmatprep.subr.mxu0 0.0
    %688 = vmatpush1.msra.mxu0 0.0
    %689 = vmatprep.subr.mxu0 0.0
    %690 = vmatpush1.msra.mxu0 0.0
    %691 = vmatprep.subr.mxu0 0.0
    %692 = vmatpush1.msra.mxu0 0.0
    %693 = vmatprep.subr.mxu0 0.0
    %694 = vmatpush1.msra.mxu0 0.0
    %695 = vmatprep.subr.mxu0 0.0
    %696 = vmatpush1.msra.mxu0 0.0
    %697 = vmatprep.subr.mxu0 0.0
    %698 = vmatpush1.msra.mxu0 0.0
    %699 = vmatprep.mubr.f32.mxu0 0.0
    %700 = vmatmul.mubr.f32.gmra.mrb[0].mxu0 %v535
    %v701 = vpop.f32.mrb[0].mxu0
    %v702 = vadd.f32 %v519, %v701
    %v703 = vpop.f32.mrb[0].mxu0
    %v704 = vadd.f32 %v519, %v703
    %705 = vmatprep.mubr.f32.mxu0 0.0
    %706 = vmatmul.mubr.f32.gmra.mrb[0].mxu0 %v538
    %v707 = vpop.f32.mrb[0].mxu0
    %v708 = vadd.f32 %v523, %v707
    %v709 = vpop.f32.mrb[0].mxu0
    %v710 = vadd.f32 %v523, %v709
    %711 = vmatprep.mubr.f32.mxu0 0.0
    %712 = vmatmul.mubr.f32.gmra.mrb[0].mxu0 %v541
    %v713 = vpop.f32.mrb[0].mxu0
    %v714 = vadd.f32 %v527, %v713
    %v715 = vpop.f32.mrb[0].mxu0
    %v716 = vadd.f32 %v527, %v715
    %717 = vmatprep.mubr.f32.mxu0 0.0
    %718 = vmatmul.mubr.f32.gmra.mrb[0].mxu0 %v544
    %v719 = vpop.f32.mrb[0].mxu0
    %v720 = vadd.f32 %v531, %v719
    %v721 = vpop.f32.mrb[0].mxu0
    %v722 = vadd.f32 %v531, %v721
    %723 = vdwg.mxu0
    %v724 = vtanh.pop %v613
    %v725 = vtanh.pop %v615
    %v726 = vtanh.pop %v702
    %v727 = vtanh.pop %v704
    %v728 = vtanh.pop %v619
    %v729 = vtanh.pop %v621
    %v730 = vtanh.pop %v708
    %v731 = vtanh.pop %v710
    %v732 = vtanh.pop %v625
    %v733 = vtanh.pop %v627
    %v734 = vtanh.pop %v714
    %v735 = vtanh.pop %v716
    %v736 = vtanh.pop %v631
    %v737 = vtanh.pop %v633
    %v738 = vtanh.pop %v720
    %v739 = vtanh.pop %v722
    %740 = vset.pattern.permute.xlu0 2
    %741 = vperm.xlu0 %740, %v86
    %v742 = vpop.permute.xlu0 %741
    %744 = vset.pattern.permute.xlu0 2
    %745 = vperm.xlu0 %744, %v87
    %v746 = vpop.permute.xlu0 %745
    %748 = vset.pattern.permute.xlu0 2
    %749 = vperm.xlu0 %748, %v88
    %v750 = vpop.permute.xlu0 %749
    %752 = vset.pattern.permute.xlu0 2
    %753 = vperm.xlu0 %752, %v89
    %v754 = vpop.permute.xlu0 %753
    %v756 = vmul.f32 %v724, %v742
    %v757 = vmul.f32 %v725, %v742
    %v758 = vmul.f32 %v726, %v742
    %v759 = vmul.f32 %v727, %v742
    %v760 = vmul.f32 %v728, %v746
    %v761 = vmul.f32 %v729, %v746
    %v762 = vmul.f32 %v730, %v746
    %v763 = vmul.f32 %v731, %v746
    %v764 = vmul.f32 %v732, %v750
    %v765 = vmul.f32 %v733, %v750
    %v766 = vmul.f32 %v734, %v750
    %v767 = vmul.f32 %v735, %v750
    %v768 = vmul.f32 %v736, %v754
    %v769 = vmul.f32 %v737, %v754
    %v770 = vmul.f32 %v738, %v754
    %v771 = vmul.f32 %v739, %v754
    %v772 = vadd.f32 %v756, %v760
    %v773 = vadd.f32 %v772, %v764
    %v774 = vadd.f32 %v773, %v768
    %v775 = vrot.slane %v774, 4
    %v776 = vadd.f32 %v774, %v775
    %v777 = vrot.slane %v776, 2
    %v778 = vadd.f32 %v776, %v777
    %v779 = vrot.slane %v778, 1
    %v780 = vadd.f32 %v778, %v779
    %v781 = vadd.f32 %v757, %v761
    %v782 = vadd.f32 %v781, %v765
    %v783 = vadd.f32 %v782, %v769
    %v784 = vrot.slane %v783, 4
    %v785 = vadd.f32 %v783, %v784
    %v786 = vrot.slane %v785, 2
    %v787 = vadd.f32 %v785, %v786
    %v788 = vrot.slane %v787, 1
    %v789 = vadd.f32 %v787, %v788
    %v790 = vadd.f32 %v758, %v762
    %v791 = vadd.f32 %v790, %v766
    %v792 = vadd.f32 %v791, %v770
    %v793 = vrot.slane %v792, 4
    %v794 = vadd.f32 %v792, %v793
    %v795 = vrot.slane %v794, 2
    %v796 = vadd.f32 %v794, %v795
    %v797 = vrot.slane %v796, 1
    %v798 = vadd.f32 %v796, %v797
    %v799 = vadd.f32 %v759, %v763
    %v800 = vadd.f32 %v799, %v767
    %v801 = vadd.f32 %v800, %v771
    %v802 = vrot.slane %v801, 4
    %v803 = vadd.f32 %v801, %v802
    %v804 = vrot.slane %v803, 2
    %v805 = vadd.f32 %v803, %v804
    %v806 = vrot.slane %v805, 1
    %v807 = vadd.f32 %v805, %v806
    %s808 = sld [smem:[#allocation2]]
    %v809 = vstv %s808
    %v810 = vadd.f32 %v780, %v809
    %v811 = vadd.f32 %v789, %v809
    %v812 = vadd.f32 %v798, %v809
    %v813 = vadd.f32 %v807, %v809
    %v818 = vcombine.low %v810, %v811
    %v819 = vcombine.low %v812, %v813
    %v821 = vunpack.c.l.s4 1966171168
    %v822 = vunpack.c.0.s8 %v821
    %v823 = vlaneseq
    %v824 = vshrl.u32 %v823, 7
    %v825 = vsub.s32 %v822, %v824
    %v826 = vrot.slane %v818, %v825
    %v828 = vunpack.c.l.s4 1966171168
    %v829 = vunpack.c.0.s8 %v828
    %v830 = vlaneseq
    %v831 = vshrl.u32 %v830, 7
    %v832 = vsub.s32 %v829, %v831
    %v833 = vrot.slane %v819, %v832
    %v834 = vcombine.low %v826, %v833
    %v836 = vunpack.c.l.s4 1966171168
    %v837 = vunpack.c.0.s8 %v836
    %v838 = vlaneseq
    %v839 = vshrl.u32 %v838, 7
    %v840 = vsub.s32 %v837, %v839
    %v841 = vrot.slane %v834, %v840
    %v843 = vlaneseq
    %vm844 = vcmp.ge.s32.totalorder %v843, 0
    %vm845 = vcmp.lt.s32.totalorder %v843, 512
    %vm846 = vmand %vm844, %vm845
    %847 = vst.msk [vmem:[#allocation3] sm:$0xf] %vm846, %v841
    // Predicated region
    $region22: #{tpu_custom_call.1} parent=1 // pred_check
      _
    $region23: #{tpu_custom_call.1} parent=1 // pred_check_branch
      %849 = sbr.rel (0) target = $region25
    $region24: #{tpu_custom_call.1} parent=1 // pred_region
      %s851 = ssub.s32 64, 64
      %852 = vsyncadd [#allocation4], %s851
      %s854 = sshll.u32 [#allocation3], 4
      %s855 = int_to_ptr.vmem [resolvable:$true] %s854
      %857 = dma.vmem_to_hbm [thread:$0]  %s855, 64, %s5, [#allocation4]
    $region25: #{tpu_custom_call.1} parent=1 // pred_fallthru
      _
    // Predicated region
    $region26: #{tpu_custom_call.1} parent=1 // pred_check
      _
    $region27: #{tpu_custom_call.1} parent=1 // pred_check_branch
      %859 = sbr.rel (0) target = $region29
    $region28: #{tpu_custom_call.1} parent=1 // pred_region
      %860 = dma.done [#allocation4], 64
    $region29: #{tpu_custom_call.1} parent=1 // pred_fallthru
      _
    %861 = vsyncpa [#allocation4], 1

</llo_original>
